<compile_context>
chip_gen: v5e
topology: v5e:2x2
jax: 0.10.0
libtpu: 0.0.40
codegen_flags: <defaults>
</compile_context>

<pallas_src>
import jax
import jax.numpy as jnp
from jax import lax
from jax.experimental import pallas as pl
from jax.experimental.pallas import tpu as pltpu


def _round_up(x, m):
    return (x + m - 1) // m * m


def _patch_embed_kernel(x_ref, w_ref, b_ref, o_ref):
    # x_ref: (TM, K) patch rows; w_ref: (E, K) conv weight (no HBM transpose);
    # b_ref: (1, E) f32 bias; o_ref: (TM, E).
    acc = lax.dot_general(
        x_ref[...], w_ref[...],
        dimension_numbers=(((1,), (1,)), ((), ())),   # (TM,K) . (E,K)^T -> (TM,E)
        preferred_element_type=jnp.float32,
    )
    o_ref[...] = (acc + b_ref[...].astype(jnp.float32)).astype(o_ref.dtype)


def patch_embed_forward(x, weight, bias, patch_size, *,
                        compute_dtype=jnp.bfloat16,
                        tm=512,
                        channels_last=False):
    """x: (B,C,H,W); weight: (E,C,p,p); bias: (E,).

    Returns (B, E, H/p, W/p) NCHW by default (matches the PyTorch module), or
    lane-dense (B, H/p, W/p, E) if channels_last=True (skips one HBM pass).
    """
    B, C, H, W = x.shape
    E = weight.shape[0]
    p = patch_size
    assert H % p == 0 and W % p == 0, "input spatial dims must be multiples of patch"
    Hp, Wp = H // p, W // p
    M = B * Hp * Wp
    K = C * p * p
    out_dtype = x.dtype

    # --- glue: non-overlapping patch gather, flattened in (C, kh, kw) order to
    # match PyTorch Conv2d weight layout (E, C, p, p). Pure layout plumbing.
    # TODO(synk): fuse this gather into the kernel (BlockSpec slabs of x over
    # (B, Hp)) to remove one full HBM pass over the activations.
    xp = x.reshape(B, C, Hp, p, Wp, p).transpose(0, 2, 4, 1, 3, 5).reshape(M, K)
    w2d = weight.reshape(E, K)                      # (E, K): no .T copy in HBM
    b2d = bias.reshape(1, E).astype(jnp.float32)

    # --- alignment + M tiling ---
    cdt = jnp.dtype(compute_dtype)
    sub = 16 if cdt.itemsize == 2 else 8            # sublane multiple for TM
    K_pad = _round_up(K, 128)
    E_pad = _round_up(E, 128)
    tm_eff = min(_round_up(tm, sub), _round_up(M, sub))
    M_pad = _round_up(M, tm_eff)

    xp = jnp.pad(xp, ((0, M_pad - M), (0, K_pad - K))).astype(compute_dtype)
    w2d = jnp.pad(w2d, ((0, E_pad - E), (0, K_pad - K))).astype(compute_dtype)
    b2d = jnp.pad(b2d, ((0, 0), (0, E_pad - E)))

    grid = (M_pad // tm_eff,)

    out = pl.pallas_call(
        _patch_embed_kernel,
        out_shape=jax.ShapeDtypeStruct((M_pad, E_pad), out_dtype),
        grid_spec=pltpu.PrefetchScalarGridSpec(
            num_scalar_prefetch=0,
            grid=grid,
            in_specs=[
                pl.BlockSpec((tm_eff, K_pad), lambda i: (i, 0)),  # streamed patches
                pl.BlockSpec((E_pad, K_pad), lambda i: (0, 0)),   # resident weight
                pl.BlockSpec((1, E_pad), lambda i: (0, 0)),       # resident bias
            ],
            out_specs=pl.BlockSpec((tm_eff, E_pad), lambda i: (i, 0)),
        ),
        compiler_params=pltpu.CompilerParams(
            # Row tiles are independent -> shard across v7x's 2 TensorCores.
            dimension_semantics=("parallel",),
        ),
    )(xp, w2d, b2d)

    out = out[:M, :E].reshape(B, Hp, Wp, E)
    if channels_last:
        return out                                   # lane-dense, preferred downstream
    # NCHW (B, E, Hp, Wp) to match the PyTorch module's output layout.
    return out.transpose(0, 3, 1, 2)


def _reference_forward(x, weight, bias, patch_size):
    # Plain-JAX strided conv reference for correctness check.
    y = lax.conv_general_dilated(
        x, weight,
        window_strides=(patch_size, patch_size),
        padding="VALID",
        dimension_numbers=("NCHW", "OIHW", "NCHW"),
    )
    return y + bias.reshape(1, -1, 1, 1)


if __name__ == "__main__":
    key = jax.random.PRNGKey(0)
    kx, kw, kb = jax.random.split(key, 3)

    # Small shapes consistent with the module: B=2, C=4, H=W=16, patch=8, E=32
    B, C, H, W = 2, 4, 16, 16
    patch = 8
    E = 32

    x = jax.random.normal(kx, (B, C, H, W), dtype=jnp.float32)
    weight = jax.random.normal(kw, (E, C, patch, patch), dtype=jnp.float32) * 0.02
    bias = jax.random.normal(kb, (E,), dtype=jnp.float32) * 0.02

    ref = _reference_forward(x, weight, bias, patch)
    Hp, Wp = H // patch, W // patch

    # f32 compute path (tight check of the kernel math).
    out_f32 = jax.block_until_ready(
        patch_embed_forward(x, weight, bias, patch, compute_dtype=jnp.float32))
    assert out_f32.shape == (B, E, Hp, Wp), out_f32.shape
    assert jnp.allclose(out_f32, ref, atol=1e-3, rtol=1e-3), "f32 mismatch vs conv reference"

    # Default bf16 MXU path (f32 accumulation) -> looser tolerance from bf16 inputs.
    out_bf16 = jax.block_until_ready(patch_embed_forward(x, weight, bias, patch))
    assert out_bf16.shape == (B, E, Hp, Wp), out_bf16.shape
    assert jnp.allclose(out_bf16, ref, atol=5e-2, rtol=5e-2), "bf16 mismatch vs conv reference"

    # Lane-dense channels_last path (skips the final NCHW transpose HBM pass).
    out_cl = jax.block_until_ready(
        patch_embed_forward(x, weight, bias, patch, channels_last=True))
    assert out_cl.shape == (B, Hp, Wp, E), out_cl.shape
    assert jnp.allclose(out_cl, jnp.transpose(ref, (0, 2, 3, 1)), atol=5e-2, rtol=5e-2), \
        "channels_last mismatch vs conv reference"

    print("KERNEL_OK")
</pallas_src>

<mosaic_0001>
module attributes {stable_mosaic.version = 11 : i64} {
  func.func @_patch_embed_kernel(%arg0: i32, %arg1: memref<8x256xf32, #tpu.memory_space<vmem>>, %arg2: memref<128x256xf32, #tpu.memory_space<vmem>>, %arg3: memref<1x128xf32, #tpu.memory_space<vmem>>, %arg4: memref<8x128xf32, #tpu.memory_space<vmem>>) attributes {dimension_semantics = [#tpu.dimension_semantics<parallel>], iteration_bounds = array<i64: 1>, scalar_prefetch = 0 : i64, scratch_operands = 0 : i64, tpu.core_type = #tpu.core_type<tc>, window_params = [{transform_indices = @transform_0, window_bounds = array<i64: 8, 256>}, {pipeline_mode = #tpu.pipeline_mode<synchronous>, transform_indices = @transform_1, window_bounds = array<i64: 128, 256>}, {pipeline_mode = #tpu.pipeline_mode<synchronous>, transform_indices = @transform_2, window_bounds = array<i64: 1, 128>}, {transform_indices = @transform_3, window_bounds = array<i64: 8, 128>}]} {
    %c0 = arith.constant 0 : index
    %c0_0 = arith.constant 0 : index
    %0 = vector.load %arg1[%c0, %c0_0] : memref<8x256xf32, #tpu.memory_space<vmem>>, vector<8x256xf32>
    %c0_1 = arith.constant 0 : index
    %c0_2 = arith.constant 0 : index
    %1 = vector.load %arg2[%c0_1, %c0_2] : memref<128x256xf32, #tpu.memory_space<vmem>>, vector<128x256xf32>
    %cst = arith.constant dense<0.000000e+00> : vector<8x128xf32>
    %2 = tpu.matmul %0, %1, %cst {dimension_numbers = #tpu.dot_dimension_numbers<[1], [1], [0], [0], [0, 0, 1, 0], [], []>} : vector<8x256xf32>, vector<128x256xf32>, vector<8x128xf32> -> vector<8x128xf32>
    %c0_3 = arith.constant 0 : index
    %c0_4 = arith.constant 0 : index
    %3 = vector.load %arg3[%c0_3, %c0_4] : memref<1x128xf32, #tpu.memory_space<vmem>>, vector<1x128xf32>
    %4 = vector.broadcast %3 : vector<1x128xf32> to vector<8x128xf32>
    %5 = arith.addf %2, %4 : vector<8x128xf32>
    %c0_5 = arith.constant 0 : index
    %c0_6 = arith.constant 0 : index
    %6 = vector.load %arg4[%c0_5, %c0_6] : memref<8x128xf32, #tpu.memory_space<vmem>>, vector<8x128xf32>
    tpu.vector_store %arg4[%c0_5, %c0_6], %5 {strides = array<i32>} : memref<8x128xf32, #tpu.memory_space<vmem>>, vector<8x128xf32>,
    return
  }
  func.func @transform_0(%arg0: i32) -> (i32, i32) {
    %c0_i32 = arith.constant 0 : i32
    %c0_i32_0 = arith.constant 0 : i32
    return %arg0, %c0_i32 : i32, i32
  }
  func.func @transform_1(%arg0: i32) -> (i32, i32) {
    %c0_i32 = arith.constant 0 : i32
    %c0_i32_0 = arith.constant 0 : i32
    %c0_i32_1 = arith.constant 0 : i32
    return %c0_i32, %c0_i32_0 : i32, i32
  }
  func.func @transform_2(%arg0: i32) -> (i32, i32) {
    %c0_i32 = arith.constant 0 : i32
    %c0_i32_0 = arith.constant 0 : i32
    %c0_i32_1 = arith.constant 0 : i32
    return %c0_i32, %c0_i32_0 : i32, i32
  }
  func.func @transform_3(%arg0: i32) -> (i32, i32) {
    %c0_i32 = arith.constant 0 : i32
    %c0_i32_0 = arith.constant 0 : i32
    return %arg0, %c0_i32 : i32, i32
  }
}

</mosaic_0001>

<llo_original>
// kernel: tpu_custom_call.1
$region0: #{tpu_custom_call.1}
  #allocation0 [shape = 'u32[]', space=smem, size = 0x4, offset = 0x4, fixed_abs, tag = 'smem constant byte address 0x4 - core index']
  #allocation1 [shape = 'u32[72,128]{1,0:T(1,128)}', space=vmem, size = 0x9000, scoped, tag = 'internal scratch']
  %s0 = inlined_call_operand.hbm [shape: f32[8,256], index: 0, kind: input, shape index: {}]
  %s1 = inlined_call_operand.hbm [shape: f32[128,256], index: 1, kind: input, shape index: {}]
  %s2 = inlined_call_operand.vmem [shape: f32[1,128], index: 2, kind: input, shape index: {}]
  %s3 = inlined_call_operand.hbm [shape: f32[8,128], index: 3, kind: output, shape index: {}]
  %s4 = sld [smem:[#allocation0]]
  $region30: #{tpu_custom_call.1} parent=0
    _
  %s6 = ssub.s32 1, %s4
  %s7 = scalar_select 0, %s6, %s4
  $region1: #{tpu_custom_call.1} parent=0
    #allocation2 [shape = 'u8[8192]{0}', space=vmem, size = 0x2000, scoped, tag = 'input window, operand 0, single buffered']
    #allocation3 [shape = 's32[1]{0}', space=sflag, size = 0x4, scoped, tag = 'scoped memory for tpu_custom_call.1']
    #allocation4 [shape = 's32[1]{0}', space=sflag, size = 0x4, scoped, tag = 'scoped memory for tpu_custom_call.1']
    #allocation5 [shape = 'u8[131072]{0}', space=vmem, size = 0x20000, scoped, tag = 'input window, operand 1, single buffered']
    #allocation6 [shape = 's32[1]{0}', space=sflag, size = 0x4, scoped, tag = 'scoped memory for tpu_custom_call.1']
    #allocation7 [shape = 'u8[4096]{0}', space=vmem, size = 0x1000, scoped, tag = 'output window, operand 0, single buffered']
    %8 = vsyncpa [#allocation3], 0
    %9 = vsyncpa [#allocation6], 0
    %10 = vsyncpa [#allocation4], 0
    // Predicated region
    $region2: #{tpu_custom_call.1} parent=1 // pred_check
      _
    $region3: #{tpu_custom_call.1} parent=1 // pred_check_branch
      %12 = sbr.rel (0) target = $region5
    $region4: #{tpu_custom_call.1} parent=1 // pred_region
      %14 = vsyncadd [#allocation3], 0
      %s16 = sshll.u32 %s0, 4
      %s17 = int_to_ptr.hbm [resolvable:$true] %s16
      %s18 = sshll.u32 [#allocation2], 4
      %s19 = int_to_ptr.vmem [resolvable:$true] %s18
      %21 = dma.hbm_to_vmem [thread:$0]  %s17, 256, %s19, [#allocation3]
    $region5: #{tpu_custom_call.1} parent=1 // pred_fallthru
      _
    // Predicated region
    $region6: #{tpu_custom_call.1} parent=1 // pred_check
      _
    $region7: #{tpu_custom_call.1} parent=1 // pred_check_branch
      %23 = sbr.rel (0) target = $region9
    $region8: #{tpu_custom_call.1} parent=1 // pred_region
      %25 = vsyncadd [#allocation6], 0
      %s26 = sshll.u32 %s1, 4
      %s27 = int_to_ptr.hbm [resolvable:$true] %s26
      %s28 = sshll.u32 [#allocation5], 4
      %s29 = int_to_ptr.vmem [resolvable:$true] %s28
      %34 = dma.hbm_to_vmem [thread:$0]  %s27, 4096, %s29, [#allocation6], 256, 256, 16
    $region9: #{tpu_custom_call.1} parent=1 // pred_fallthru
      _
    // Predicated region
    $region10: #{tpu_custom_call.1} parent=1 // pred_check
      _
    $region11: #{tpu_custom_call.1} parent=1 // pred_check_branch
      %36 = sbr.rel (0) target = $region13
    $region12: #{tpu_custom_call.1} parent=1 // pred_region
      _
    $region13: #{tpu_custom_call.1} parent=1 // pred_fallthru
      _
    // Predicated region
    $region14: #{tpu_custom_call.1} parent=1 // pred_check
      _
    $region15: #{tpu_custom_call.1} parent=1 // pred_check_branch
      %38 = sbr.rel (0) target = $region17
    $region16: #{tpu_custom_call.1} parent=1 // pred_region
      %40 = dma.done [#allocation3], 256
    $region17: #{tpu_custom_call.1} parent=1 // pred_fallthru
      _
    // Predicated region
    $region18: #{tpu_custom_call.1} parent=1 // pred_check
      _
    $region19: #{tpu_custom_call.1} parent=1 // pred_check_branch
      %42 = sbr.rel (0) target = $region21
    $region20: #{tpu_custom_call.1} parent=1 // pred_region
      %44 = dma.done [#allocation6], 4096
    $region21: #{tpu_custom_call.1} parent=1 // pred_fallthru
      _
    %v45 = vld [vmem:[#allocation2] sm:$0xff]
    %v46 = vld [vmem:[#allocation2 + $0x8] sm:$0xff]
    %v47 = vld [vmem:[#allocation5] sm:$0xff]
    %v48 = vld [vmem:[#allocation5 + $0x8] sm:$0xff]
    %v49 = vld [vmem:[#allocation5 + $0x10] sm:$0xff]
    %v50 = vld [vmem:[#allocation5 + $0x18] sm:$0xff]
    %v51 = vld [vmem:[#allocation5 + $0x20] sm:$0xff]
    %v52 = vld [vmem:[#allocation5 + $0x28] sm:$0xff]
    %v53 = vld [vmem:[#allocation5 + $0x30] sm:$0xff]
    %v54 = vld [vmem:[#allocation5 + $0x38] sm:$0xff]
    %v55 = vld [vmem:[#allocation5 + $0x40] sm:$0xff]
    %v56 = vld [vmem:[#allocation5 + $0x48] sm:$0xff]
    %v57 = vld [vmem:[#allocation5 + $0x50] sm:$0xff]
    %v58 = vld [vmem:[#allocation5 + $0x58] sm:$0xff]
    %v59 = vld [vmem:[#allocation5 + $0x60] sm:$0xff]
    %v60 = vld [vmem:[#allocation5 + $0x68] sm:$0xff]
    %v61 = vld [vmem:[#allocation5 + $0x70] sm:$0xff]
    %v62 = vld [vmem:[#allocation5 + $0x78] sm:$0xff]
    %v63 = vld [vmem:[#allocation5 + $0x80] sm:$0xff]
    %v64 = vld [vmem:[#allocation5 + $0x88] sm:$0xff]
    %v65 = vld [vmem:[#allocation5 + $0x90] sm:$0xff]
    %v66 = vld [vmem:[#allocation5 + $0x98] sm:$0xff]
    %v67 = vld [vmem:[#allocation5 + $0xa0] sm:$0xff]
    %v68 = vld [vmem:[#allocation5 + $0xa8] sm:$0xff]
    %v69 = vld [vmem:[#allocation5 + $0xb0] sm:$0xff]
    %v70 = vld [vmem:[#allocation5 + $0xb8] sm:$0xff]
    %v71 = vld [vmem:[#allocation5 + $0xc0] sm:$0xff]
    %v72 = vld [vmem:[#allocation5 + $0xc8] sm:$0xff]
    %v73 = vld [vmem:[#allocation5 + $0xd0] sm:$0xff]
    %v74 = vld [vmem:[#allocation5 + $0xd8] sm:$0xff]
    %v75 = vld [vmem:[#allocation5 + $0xe0] sm:$0xff]
    %v76 = vld [vmem:[#allocation5 + $0xe8] sm:$0xff]
    %v77 = vld [vmem:[#allocation5 + $0xf0] sm:$0xff]
    %v78 = vld [vmem:[#allocation5 + $0xf8] sm:$0xff]
    %v79 = vld [vmem:[%s2] sm:$0x1]
    %v81 = vperm.slane %v79, 0
    %83 = vmatpush.xpose.msra.mxu0 %v77
    %84 = vmatpush.xpose.msra.mxu0 %v75
    %85 = vmatpush.xpose.msra.mxu0 %v73
    %86 = vmatpush.xpose.msra.mxu0 %v71
    %87 = vmatpush.xpose.msra.mxu0 %v69
    %88 = vmatpush.xpose.msra.mxu0 %v67
    %89 = vmatpush.xpose.msra.mxu0 %v65
    %90 = vmatpush.xpose.msra.mxu0 %v63
    %91 = vmatpush.xpose.msra.mxu0 %v61
    %92 = vmatpush.xpose.msra.mxu0 %v59
    %93 = vmatpush.xpose.msra.mxu0 %v57
    %94 = vmatpush.xpose.msra.mxu0 %v55
    %95 = vmatpush.xpose.msra.mxu0 %v53
    %96 = vmatpush.xpose.msra.mxu0 %v51
    %97 = vmatpush.xpose.msra.mxu0 %v49
    %98 = vmatpush.xpose.msra.mxu0 %v47
    %99 = vmatmul.f32.gmra.mxu0 %v45
    %v100 = vpop.f32.mrf.mxu0
    %v101 = vadd.f32 %v81, %v100
    %102 = vdwg.mxu0
    %103 = vmatpush.xpose.msra.mxu0 %v78
    %104 = vmatpush.xpose.msra.mxu0 %v76
    %105 = vmatpush.xpose.msra.mxu0 %v74
    %106 = vmatpush.xpose.msra.mxu0 %v72
    %107 = vmatpush.xpose.msra.mxu0 %v70
    %108 = vmatpush.xpose.msra.mxu0 %v68
    %109 = vmatpush.xpose.msra.mxu0 %v66
    %110 = vmatpush.xpose.msra.mxu0 %v64
    %111 = vmatpush.xpose.msra.mxu0 %v62
    %112 = vmatpush.xpose.msra.mxu0 %v60
    %113 = vmatpush.xpose.msra.mxu0 %v58
    %114 = vmatpush.xpose.msra.mxu0 %v56
    %115 = vmatpush.xpose.msra.mxu0 %v54
    %116 = vmatpush.xpose.msra.mxu0 %v52
    %117 = vmatpush.xpose.msra.mxu0 %v50
    %118 = vmatpush.xpose.msra.mxu0 %v48
    %119 = vmatmul.f32.gmra.mxu0 %v46
    %v120 = vpop.f32.mrf.mxu0
    %v121 = vadd.f32 %v101, %v120
    %122 = vdwg.mxu0
    %123 = vst [vmem:[#allocation7] sm:$0xff] %v121
    // Predicated region
    $region22: #{tpu_custom_call.1} parent=1 // pred_check
      _
    $region23: #{tpu_custom_call.1} parent=1 // pred_check_branch
      %125 = sbr.rel (0) target = $region25
    $region24: #{tpu_custom_call.1} parent=1 // pred_region
      %127 = vsyncadd [#allocation4], 0
      %s129 = sshll.u32 [#allocation7], 4
      %s130 = int_to_ptr.vmem [resolvable:$true] %s129
      %s131 = sshll.u32 %s3, 4
      %s132 = int_to_ptr.hbm [resolvable:$true] %s131
      %134 = dma.vmem_to_hbm [thread:$0]  %s130, 128, %s132, [#allocation4]
    $region25: #{tpu_custom_call.1} parent=1 // pred_fallthru
      _
    // Predicated region
    $region26: #{tpu_custom_call.1} parent=1 // pred_check
      _
    $region27: #{tpu_custom_call.1} parent=1 // pred_check_branch
      %136 = sbr.rel (0) target = $region29
    $region28: #{tpu_custom_call.1} parent=1 // pred_region
      %138 = dma.done [#allocation4], 128
    $region29: #{tpu_custom_call.1} parent=1 // pred_fallthru
      _
    %139 = vsyncpa [#allocation3], 1
    %140 = vsyncpa [#allocation6], 1
    %141 = vsyncpa [#allocation4], 1

</llo_original>
